<compile_context>
chip_gen: v7x
topology: tpu7x:2x2x1
jax: 0.10.0
libtpu: 0.0.40
codegen_flags: <defaults>
</compile_context>

<pallas_src>
import functools

import jax
import jax.numpy as jnp
from jax.experimental import pallas as pl
from jax.experimental.pallas import tpu as pltpu


def pwff_kernel(x_ref, w1_ref, b1_ref, w2_ref, b2_ref, g_ref, bln_ref, o_ref,
                *, compute_dtype):
    # x_ref: (TM, D)  w1: (D, H)  b1: (1, H)  w2: (H, D)  b2: (1, D)
    # g/bln: (1, D)   o_ref: (TM, D)
    x = x_ref[...].astype(jnp.float32)

    # Linear(inp_dim -> hidden[0]) + ReLU   (MXU, f32 accumulate)
    h = jnp.dot(x.astype(compute_dtype), w1_ref[...].astype(compute_dtype),
                preferred_element_type=jnp.float32) + b1_ref[...]
    h = jnp.maximum(h, 0.0)

    # Linear(hidden[0] -> hidden[1])
    y = jnp.dot(h.astype(compute_dtype), w2_ref[...].astype(compute_dtype),
                preferred_element_type=jnp.float32) + b2_ref[...]

    # residual:  outputs += inputs   (requires hidden[1] == inp_dim)
    y = y + x

    # LayerNorm(inp_dim), eps = 1e-5 (PyTorch default), elementwise affine.
    # gamma is fused into the rsqrt scale: out = (y - mean) * (gamma*rstd) + beta
    mean = jnp.mean(y, axis=-1, keepdims=True)
    var = jnp.mean((y - mean) * (y - mean), axis=-1, keepdims=True)
    scale = g_ref[...] * jax.lax.rsqrt(var + 1e-5)
    o_ref[...] = ((y - mean) * scale + bln_ref[...]).astype(o_ref.dtype)


def pointwise_ff(x, w1, b1, w2, b2, gamma, beta, *, tm=256,
                 compute_dtype=jnp.float32):
    """x: (B, S, D) float32.  Returns (B, S, D).

    tm: row tile (rows of B*S processed per grid step).  Default 256 keeps the
        MXU M dimension full on v5e/v6e/v7x.  compute_dtype=jnp.bfloat16 gives
        a 2-3x matmul speedup on v6e/v7x at reduced precision.
    """
    B, S, D = x.shape
    H = w1.shape[1]
    N = B * S
    x2 = x.reshape(N, D)

    # Effective tile: never larger than the (8-aligned) problem size, so small
    # inputs don't pad all the way up to tm; keep it a multiple of 8 for the
    # (8, 128) sublane constraint.
    n_min = max(8, ((N + 7) // 8) * 8)
    tm_eff = min(tm, n_min)
    n_pad = pl.cdiv(n_min, tm_eff) * tm_eff
    if n_pad != N:
        x2 = jnp.pad(x2, ((0, n_pad - N), (0, 0)))
    grid = (n_pad // tm_eff,)

    out = pl.pallas_call(
        functools.partial(pwff_kernel, compute_dtype=compute_dtype),
        out_shape=jax.ShapeDtypeStruct((n_pad, D), x.dtype),
        grid_spec=pltpu.PrefetchScalarGridSpec(
            num_scalar_prefetch=0,
            grid=grid,
            in_specs=[
                pl.BlockSpec((tm_eff, D), lambda i: (i, 0)),  # x rows
                pl.BlockSpec((D, H), lambda i: (0, 0)),       # W1 (constant)
                pl.BlockSpec((1, H), lambda i: (0, 0)),       # b1 (constant)
                pl.BlockSpec((H, D), lambda i: (0, 0)),       # W2 (constant)
                pl.BlockSpec((1, D), lambda i: (0, 0)),       # b2 (constant)
                pl.BlockSpec((1, D), lambda i: (0, 0)),       # gamma (constant)
                pl.BlockSpec((1, D), lambda i: (0, 0)),       # beta (constant)
            ],
            out_specs=pl.BlockSpec((tm_eff, D), lambda i: (i, 0)),
        ),
        compiler_params=pltpu.CompilerParams(
            dimension_semantics=("parallel",),   # shards rows across v7x cores
            vmem_limit_bytes=32 << 20,
        ),
    )(x2, w1, b1, w2, b2, gamma, beta)

    if n_pad != N:
        out = out[:N]
    return out.reshape(B, S, D)


def reference(x, w1, b1, w2, b2, gamma, beta):
    h = jnp.maximum(x @ w1 + b1, 0.0)
    y = h @ w2 + b2 + x
    mean = jnp.mean(y, axis=-1, keepdims=True)
    var = jnp.mean((y - mean) ** 2, axis=-1, keepdims=True)
    return (y - mean) / jnp.sqrt(var + 1e-5) * gamma + beta


if __name__ == "__main__":
    # Module config (small, consistent with forward semantics:
    # residual + LayerNorm(inp_dim) require hidden_dims[1] == inp_dim).
    inp_dim = 128
    hidden_dims = [256, 128]
    B, S = 2, 8

    key = jax.random.PRNGKey(0)
    k_x, k_w1, k_b1, k_w2, k_b2 = jax.random.split(key, 5)

    # Deterministic PyTorch-style init: U(-1/sqrt(fan_in), 1/sqrt(fan_in)).
    lim1 = 1.0 / (inp_dim ** 0.5)
    lim2 = 1.0 / (hidden_dims[0] ** 0.5)
    w1 = jax.random.uniform(k_w1, (inp_dim, hidden_dims[0]), jnp.float32, -lim1, lim1)
    b1 = jax.random.uniform(k_b1, (1, hidden_dims[0]), jnp.float32, -lim1, lim1)
    w2 = jax.random.uniform(k_w2, (hidden_dims[0], hidden_dims[1]), jnp.float32, -lim2, lim2)
    b2 = jax.random.uniform(k_b2, (1, hidden_dims[1]), jnp.float32, -lim2, lim2)
    gamma = jnp.ones((1, inp_dim), jnp.float32)   # LayerNorm weight init
    beta = jnp.zeros((1, inp_dim), jnp.float32)   # LayerNorm bias init

    x = jax.random.normal(k_x, (B, S, inp_dim), jnp.float32)

    out = pointwise_ff(x, w1, b1, w2, b2, gamma, beta)
    out = jax.block_until_ready(out)

    ref = reference(x.reshape(-1, inp_dim), w1, b1, w2, b2, gamma, beta).reshape(B, S, inp_dim)
    assert jnp.allclose(out, ref, atol=1e-4, rtol=1e-4), "mismatch vs reference"

    print("KERNEL_OK")
</pallas_src>

<mosaic_0001>
module attributes {stable_mosaic.version = 11 : i64} {
  func.func @pwff_kernel(%arg0: i32, %arg1: memref<16x128xf32, #tpu.memory_space<vmem>>, %arg2: memref<128x256xf32, #tpu.memory_space<vmem>>, %arg3: memref<1x256xf32, #tpu.memory_space<vmem>>, %arg4: memref<256x128xf32, #tpu.memory_space<vmem>>, %arg5: memref<1x128xf32, #tpu.memory_space<vmem>>, %arg6: memref<1x128xf32, #tpu.memory_space<vmem>>, %arg7: memref<1x128xf32, #tpu.memory_space<vmem>>, %arg8: memref<16x128xf32, #tpu.memory_space<vmem>>) attributes {dimension_semantics = [#tpu.dimension_semantics<parallel>], iteration_bounds = array<i64: 1>, scalar_prefetch = 0 : i64, scratch_operands = 0 : i64, tpu.core_type = #tpu.core_type<tc>, window_params = [{transform_indices = @transform_0, window_bounds = array<i64: 16, 128>}, {pipeline_mode = #tpu.pipeline_mode<synchronous>, transform_indices = @transform_1, window_bounds = array<i64: 128, 256>}, {pipeline_mode = #tpu.pipeline_mode<synchronous>, transform_indices = @transform_2, window_bounds = array<i64: 1, 256>}, {pipeline_mode = #tpu.pipeline_mode<synchronous>, transform_indices = @transform_3, window_bounds = array<i64: 256, 128>}, {pipeline_mode = #tpu.pipeline_mode<synchronous>, transform_indices = @transform_4, window_bounds = array<i64: 1, 128>}, {pipeline_mode = #tpu.pipeline_mode<synchronous>, transform_indices = @transform_5, window_bounds = array<i64: 1, 128>}, {pipeline_mode = #tpu.pipeline_mode<synchronous>, transform_indices = @transform_6, window_bounds = array<i64: 1, 128>}, {transform_indices = @transform_7, window_bounds = array<i64: 16, 128>}]} {
    %c0 = arith.constant 0 : index
    %c0_0 = arith.constant 0 : index
    %0 = vector.load %arg1[%c0, %c0_0] : memref<16x128xf32, #tpu.memory_space<vmem>>, vector<16x128xf32>
    %c0_1 = arith.constant 0 : index
    %c0_2 = arith.constant 0 : index
    %1 = vector.load %arg2[%c0_1, %c0_2] : memref<128x256xf32, #tpu.memory_space<vmem>>, vector<128x256xf32>
    %cst = arith.constant dense<0.000000e+00> : vector<16x256xf32>
    %2 = tpu.matmul %0, %1, %cst {dimension_numbers = #tpu.dot_dimension_numbers<[1], [0], [0], [1], [0, 0, 1, 1], [], []>} : vector<16x128xf32>, vector<128x256xf32>, vector<16x256xf32> -> vector<16x256xf32>
    %c0_3 = arith.constant 0 : index
    %c0_4 = arith.constant 0 : index
    %3 = vector.load %arg3[%c0_3, %c0_4] : memref<1x256xf32, #tpu.memory_space<vmem>>, vector<1x256xf32>
    %4 = vector.broadcast %3 : vector<1x256xf32> to vector<16x256xf32>
    %5 = arith.addf %2, %4 : vector<16x256xf32>
    %cst_5 = arith.constant 0.000000e+00 : f32
    %6 = vector.broadcast %cst_5 : f32 to vector<16x256xf32>
    %7 = arith.maximumf %5, %6 : vector<16x256xf32>
    %c0_6 = arith.constant 0 : index
    %c0_7 = arith.constant 0 : index
    %8 = vector.load %arg4[%c0_6, %c0_7] : memref<256x128xf32, #tpu.memory_space<vmem>>, vector<256x128xf32>
    %cst_8 = arith.constant dense<0.000000e+00> : vector<16x128xf32>
    %9 = tpu.matmul %7, %8, %cst_8 {dimension_numbers = #tpu.dot_dimension_numbers<[1], [0], [0], [1], [0, 0, 1, 1], [], []>} : vector<16x256xf32>, vector<256x128xf32>, vector<16x128xf32> -> vector<16x128xf32>
    %c0_9 = arith.constant 0 : index
    %c0_10 = arith.constant 0 : index
    %10 = vector.load %arg5[%c0_9, %c0_10] : memref<1x128xf32, #tpu.memory_space<vmem>>, vector<1x128xf32>
    %11 = vector.broadcast %10 : vector<1x128xf32> to vector<16x128xf32>
    %12 = arith.addf %9, %11 : vector<16x128xf32>
    %13 = arith.addf %12, %0 : vector<16x128xf32>
    %cst_11 = arith.constant dense<0.000000e+00> : vector<16xf32>
    %14 = vector.multi_reduction <add>, %13, %cst_11 [1] : vector<16x128xf32> to vector<16xf32>
    %15 = vector.shape_cast %14 : vector<16xf32> to vector<16x1xf32>
    %cst_12 = arith.constant 1.280000e+02 : f32
    %16 = vector.broadcast %cst_12 : f32 to vector<16x1xf32>
    %17 = arith.divf %15, %16 : vector<16x1xf32>
    %18 = vector.broadcast %17 : vector<16x1xf32> to vector<16x128xf32>
    %19 = arith.subf %13, %18 : vector<16x128xf32>
    %20 = vector.broadcast %17 : vector<16x1xf32> to vector<16x128xf32>
    %21 = arith.subf %13, %20 : vector<16x128xf32>
    %22 = arith.mulf %19, %21 : vector<16x128xf32>
    %cst_13 = arith.constant dense<0.000000e+00> : vector<16xf32>
    %23 = vector.multi_reduction <add>, %22, %cst_13 [1] : vector<16x128xf32> to vector<16xf32>
    %24 = vector.shape_cast %23 : vector<16xf32> to vector<16x1xf32>
    %cst_14 = arith.constant 1.280000e+02 : f32
    %25 = vector.broadcast %cst_14 : f32 to vector<16x1xf32>
    %26 = arith.divf %24, %25 : vector<16x1xf32>
    %c0_15 = arith.constant 0 : index
    %c0_16 = arith.constant 0 : index
    %27 = vector.load %arg6[%c0_15, %c0_16] : memref<1x128xf32, #tpu.memory_space<vmem>>, vector<1x128xf32>
    %cst_17 = arith.constant 9.99999974E-6 : f32
    %28 = vector.broadcast %cst_17 : f32 to vector<16x1xf32>
    %29 = arith.addf %26, %28 : vector<16x1xf32>
    %30 = math.rsqrt %29 : vector<16x1xf32>
    %31 = vector.broadcast %27 : vector<1x128xf32> to vector<16x128xf32>
    %32 = vector.broadcast %30 : vector<16x1xf32> to vector<16x128xf32>
    %33 = arith.mulf %31, %32 : vector<16x128xf32>
    %34 = vector.broadcast %17 : vector<16x1xf32> to vector<16x128xf32>
    %35 = arith.subf %13, %34 : vector<16x128xf32>
    %36 = arith.mulf %35, %33 : vector<16x128xf32>
    %c0_18 = arith.constant 0 : index
    %c0_19 = arith.constant 0 : index
    %37 = vector.load %arg7[%c0_18, %c0_19] : memref<1x128xf32, #tpu.memory_space<vmem>>, vector<1x128xf32>
    %38 = vector.broadcast %37 : vector<1x128xf32> to vector<16x128xf32>
    %39 = arith.addf %36, %38 : vector<16x128xf32>
    %c0_20 = arith.constant 0 : index
    %c0_21 = arith.constant 0 : index
    %40 = vector.load %arg8[%c0_20, %c0_21] : memref<16x128xf32, #tpu.memory_space<vmem>>, vector<16x128xf32>
    tpu.vector_store %arg8[%c0_20, %c0_21], %39 {strides = array<i32>} : memref<16x128xf32, #tpu.memory_space<vmem>>, vector<16x128xf32>,
    return
  }
  func.func @transform_0(%arg0: i32) -> (i32, i32) {
    %c0_i32 = arith.constant 0 : i32
    %c0_i32_0 = arith.constant 0 : i32
    return %arg0, %c0_i32 : i32, i32
  }
  func.func @transform_1(%arg0: i32) -> (i32, i32) {
    %c0_i32 = arith.constant 0 : i32
    %c0_i32_0 = arith.constant 0 : i32
    %c0_i32_1 = arith.constant 0 : i32
    return %c0_i32, %c0_i32_0 : i32, i32
  }
  func.func @transform_2(%arg0: i32) -> (i32, i32) {
    %c0_i32 = arith.constant 0 : i32
    %c0_i32_0 = arith.constant 0 : i32
    %c0_i32_1 = arith.constant 0 : i32
    return %c0_i32, %c0_i32_0 : i32, i32
  }
  func.func @transform_3(%arg0: i32) -> (i32, i32) {
    %c0_i32 = arith.constant 0 : i32
    %c0_i32_0 = arith.constant 0 : i32
    %c0_i32_1 = arith.constant 0 : i32
    return %c0_i32, %c0_i32_0 : i32, i32
  }
  func.func @transform_4(%arg0: i32) -> (i32, i32) {
    %c0_i32 = arith.constant 0 : i32
    %c0_i32_0 = arith.constant 0 : i32
    %c0_i32_1 = arith.constant 0 : i32
    return %c0_i32, %c0_i32_0 : i32, i32
  }
  func.func @transform_5(%arg0: i32) -> (i32, i32) {
    %c0_i32 = arith.constant 0 : i32
    %c0_i32_0 = arith.constant 0 : i32
    %c0_i32_1 = arith.constant 0 : i32
    return %c0_i32, %c0_i32_0 : i32, i32
  }
  func.func @transform_6(%arg0: i32) -> (i32, i32) {
    %c0_i32 = arith.constant 0 : i32
    %c0_i32_0 = arith.constant 0 : i32
    %c0_i32_1 = arith.constant 0 : i32
    return %c0_i32, %c0_i32_0 : i32, i32
  }
  func.func @transform_7(%arg0: i32) -> (i32, i32) {
    %c0_i32 = arith.constant 0 : i32
    %c0_i32_0 = arith.constant 0 : i32
    return %arg0, %c0_i32 : i32, i32
  }
}

</mosaic_0001>

<llo_original>
// kernel: tpu_custom_call.1
$region0: #{tpu_custom_call.1}
  #allocation0 [shape = 'u32[]', space=smem, size = 0x4, offset = 0x4, fixed_abs, tag = 'smem constant byte address 0x4 - core index']
  #allocation1 [shape = 'u32[144,128]{1,0:T(1,128)}', space=vmem, size = 0x12000, scoped, tag = 'internal scratch']
  %s0 = inlined_call_operand.hbm [shape: f32[16,128], index: 0, kind: input, shape index: {}]
  %s1 = inlined_call_operand.hbm [shape: f32[128,256], index: 1, kind: input, shape index: {}]
  %s2 = inlined_call_operand.vmem [shape: f32[1,256], index: 2, kind: input, shape index: {}]
  %s3 = inlined_call_operand.hbm [shape: f32[256,128], index: 3, kind: input, shape index: {}]
  %s4 = inlined_call_operand.vmem [shape: f32[1,128], index: 4, kind: input, shape index: {}]
  %s5 = inlined_call_operand.vmem [shape: f32[1,128], index: 5, kind: input, shape index: {}]
  %s6 = inlined_call_operand.vmem [shape: f32[1,128], index: 6, kind: input, shape index: {}]
  %s7 = inlined_call_operand.hbm [shape: f32[16,128], index: 7, kind: output, shape index: {}]
  %s8 = sld [smem:[#allocation0]]
  $region50: #{tpu_custom_call.1} parent=0
    _
  %s10 = ssub.s32 1, %s8
  %s11 = scalar_select 0, %s10, %s8
  $region1: #{tpu_custom_call.1} parent=0
    #allocation2 [shape = 'u8[8192]{0}', space=vmem, size = 0x2000, scoped, tag = 'input window, operand 0, single buffered']
    #allocation3 [shape = 's32[1]{0}', space=sflag, size = 0x4, scoped, tag = 'scoped memory for tpu_custom_call.1']
    #allocation4 [shape = 's32[1]{0}', space=sflag, size = 0x4, scoped, tag = 'scoped memory for tpu_custom_call.1']
    #allocation5 [shape = 'u8[131072]{0}', space=vmem, size = 0x20000, scoped, tag = 'input window, operand 1, single buffered']
    #allocation6 [shape = 's32[1]{0}', space=sflag, size = 0x4, scoped, tag = 'scoped memory for tpu_custom_call.1']
    #allocation7 [shape = 'u8[131072]{0}', space=vmem, size = 0x20000, scoped, tag = 'input window, operand 3, single buffered']
    #allocation8 [shape = 'u8[8192]{0}', space=vmem, size = 0x2000, scoped, tag = 'output window, operand 0, single buffered']
    %12 = vsyncpa [#allocation3], 0
    %13 = vsyncpa [#allocation6], 0
    %14 = vsyncpa [#allocation4], 0
    // Predicated region
    $region2: #{tpu_custom_call.1} parent=1 // pred_check
      _
    $region3: #{tpu_custom_call.1} parent=1 // pred_check_branch
      %16 = sbr.rel (0) target = $region5
    $region4: #{tpu_custom_call.1} parent=1 // pred_region
      %s18 = ssub.s32 256, 256
      %19 = vsyncadd [#allocation3], %s18
      %s20 = sshll.u32 [#allocation2], 4
      %s21 = int_to_ptr.vmem [resolvable:$true] %s20
      %26 = dma.hbm_to_vmem [thread:$0]  %s0, 256, %s21, [#allocation3], 128, 128, 8
    $region5: #{tpu_custom_call.1} parent=1 // pred_fallthru
      _
    // Predicated region
    $region6: #{tpu_custom_call.1} parent=1 // pred_check
      _
    $region7: #{tpu_custom_call.1} parent=1 // pred_check_branch
      %28 = sbr.rel (0) target = $region9
    $region8: #{tpu_custom_call.1} parent=1 // pred_region
      %s30 = ssub.s32 4096, 4096
      %31 = vsyncadd [#allocation6], %s30
      %s32 = sshll.u32 [#allocation5], 4
      %s33 = int_to_ptr.vmem [resolvable:$true] %s32
      %38 = dma.hbm_to_vmem [thread:$0]  %s1, 4096, %s33, [#allocation6], 256, 256, 16
    $region9: #{tpu_custom_call.1} parent=1 // pred_fallthru
      _
    // Predicated region
    $region10: #{tpu_custom_call.1} parent=1 // pred_check
      _
    $region11: #{tpu_custom_call.1} parent=1 // pred_check_branch
      %40 = sbr.rel (0) target = $region13
    $region12: #{tpu_custom_call.1} parent=1 // pred_region
      _
    $region13: #{tpu_custom_call.1} parent=1 // pred_fallthru
      _
    // Predicated region
    $region14: #{tpu_custom_call.1} parent=1 // pred_check
      _
    $region15: #{tpu_custom_call.1} parent=1 // pred_check_branch
      %42 = sbr.rel (0) target = $region17
    $region16: #{tpu_custom_call.1} parent=1 // pred_region
      %s44 = ssub.s32 4096, 4096
      %45 = vsyncadd [#allocation6], %s44
      %s46 = sshll.u32 [#allocation7], 4
      %s47 = int_to_ptr.vmem [resolvable:$true] %s46
      %52 = dma.hbm_to_vmem [thread:$0]  %s3, 4096, %s47, [#allocation6], 128, 128, 8
    $region17: #{tpu_custom_call.1} parent=1 // pred_fallthru
      _
    // Predicated region
    $region18: #{tpu_custom_call.1} parent=1 // pred_check
      _
    $region19: #{tpu_custom_call.1} parent=1 // pred_check_branch
      %54 = sbr.rel (0) target = $region21
    $region20: #{tpu_custom_call.1} parent=1 // pred_region
      _
    $region21: #{tpu_custom_call.1} parent=1 // pred_fallthru
      _
    // Predicated region
    $region22: #{tpu_custom_call.1} parent=1 // pred_check
      _
    $region23: #{tpu_custom_call.1} parent=1 // pred_check_branch
      %56 = sbr.rel (0) target = $region25
    $region24: #{tpu_custom_call.1} parent=1 // pred_region
      _
    $region25: #{tpu_custom_call.1} parent=1 // pred_fallthru
      _
    // Predicated region
    $region26: #{tpu_custom_call.1} parent=1 // pred_check
      _
    $region27: #{tpu_custom_call.1} parent=1 // pred_check_branch
      %58 = sbr.rel (0) target = $region29
    $region28: #{tpu_custom_call.1} parent=1 // pred_region
      _
    $region29: #{tpu_custom_call.1} parent=1 // pred_fallthru
      _
    // Predicated region
    $region30: #{tpu_custom_call.1} parent=1 // pred_check
      _
    $region31: #{tpu_custom_call.1} parent=1 // pred_check_branch
      %60 = sbr.rel (0) target = $region33
    $region32: #{tpu_custom_call.1} parent=1 // pred_region
      %61 = dma.done [#allocation3], 256
    $region33: #{tpu_custom_call.1} parent=1 // pred_fallthru
      _
    // Predicated region
    $region34: #{tpu_custom_call.1} parent=1 // pred_check
      _
    $region35: #{tpu_custom_call.1} parent=1 // pred_check_branch
      %63 = sbr.rel (0) target = $region37
    $region36: #{tpu_custom_call.1} parent=1 // pred_region
      %64 = dma.done [#allocation6], 4096
    $region37: #{tpu_custom_call.1} parent=1 // pred_fallthru
      _
    // Predicated region
    $region38: #{tpu_custom_call.1} parent=1 // pred_check
      _
    $region39: #{tpu_custom_call.1} parent=1 // pred_check_branch
      %66 = sbr.rel (0) target = $region41
    $region40: #{tpu_custom_call.1} parent=1 // pred_region
      %67 = dma.done [#allocation6], 4096
    $region41: #{tpu_custom_call.1} parent=1 // pred_fallthru
      _
    %v68 = vld [vmem:[#allocation2] sm:$0xff]
    %v69 = vld [vmem:[#allocation2 + $0x8] sm:$0xff]
    %v70 = vld [vmem:[#allocation5] sm:$0xff]
    %v71 = vld [vmem:[#allocation5 + $0x8] sm:$0xff]
    %v72 = vld [vmem:[#allocation5 + $0x10] sm:$0xff]
    %v73 = vld [vmem:[#allocation5 + $0x18] sm:$0xff]
    %v74 = vld [vmem:[#allocation5 + $0x20] sm:$0xff]
    %v75 = vld [vmem:[#allocation5 + $0x28] sm:$0xff]
    %v76 = vld [vmem:[#allocation5 + $0x30] sm:$0xff]
    %v77 = vld [vmem:[#allocation5 + $0x38] sm:$0xff]
    %v78 = vld [vmem:[#allocation5 + $0x40] sm:$0xff]
    %v79 = vld [vmem:[#allocation5 + $0x48] sm:$0xff]
    %v80 = vld [vmem:[#allocation5 + $0x50] sm:$0xff]
    %v81 = vld [vmem:[#allocation5 + $0x58] sm:$0xff]
    %v82 = vld [vmem:[#allocation5 + $0x60] sm:$0xff]
    %v83 = vld [vmem:[#allocation5 + $0x68] sm:$0xff]
    %v84 = vld [vmem:[#allocation5 + $0x70] sm:$0xff]
    %v85 = vld [vmem:[#allocation5 + $0x78] sm:$0xff]
    %v86 = vld [vmem:[#allocation5 + $0x80] sm:$0xff]
    %v87 = vld [vmem:[#allocation5 + $0x88] sm:$0xff]
    %v88 = vld [vmem:[#allocation5 + $0x90] sm:$0xff]
    %v89 = vld [vmem:[#allocation5 + $0x98] sm:$0xff]
    %v90 = vld [vmem:[#allocation5 + $0xa0] sm:$0xff]
    %v91 = vld [vmem:[#allocation5 + $0xa8] sm:$0xff]
    %v92 = vld [vmem:[#allocation5 + $0xb0] sm:$0xff]
    %v93 = vld [vmem:[#allocation5 + $0xb8] sm:$0xff]
    %v94 = vld [vmem:[#allocation5 + $0xc0] sm:$0xff]
    %v95 = vld [vmem:[#allocation5 + $0xc8] sm:$0xff]
    %v96 = vld [vmem:[#allocation5 + $0xd0] sm:$0xff]
    %v97 = vld [vmem:[#allocation5 + $0xd8] sm:$0xff]
    %v98 = vld [vmem:[#allocation5 + $0xe0] sm:$0xff]
    %v99 = vld [vmem:[#allocation5 + $0xe8] sm:$0xff]
    %v100 = vld [vmem:[#allocation5 + $0xf0] sm:$0xff]
    %v101 = vld [vmem:[#allocation5 + $0xf8] sm:$0xff]
    %v102 = vld [vmem:[%s2] sm:$0x3]
    %v104 = vlaneseq
    %v105 = vshrl.u32 %v104, 7
    %v106 = vsub.s32 0, %v105
    %v107 = vrot.slane %v102, %v106
    %v108 = vlaneseq
    %v109 = vshrl.u32 %v108, 7
    %v110 = vsub.s32 1, %v109
    %v111 = vrot.slane %v102, %v110
    %114 = vmatprep.subr.mxu0 %v71
    %115 = vmatpush1.msra.mxu0 %v70
    %116 = vmatprep.subr.mxu0 %v73
    %117 = vmatpush1.msra.mxu0 %v72
    %118 = vmatprep.subr.mxu0 %v75
    %119 = vmatpush1.msra.mxu0 %v74
    %120 = vmatprep.subr.mxu0 %v77
    %121 = vmatpush1.msra.mxu0 %v76
    %122 = vmatprep.subr.mxu0 %v79
    %123 = vmatpush1.msra.mxu0 %v78
    %124 = vmatprep.subr.mxu0 %v81
    %125 = vmatpush1.msra.mxu0 %v80
    %126 = vmatprep.subr.mxu0 %v83
    %127 = vmatpush1.msra.mxu0 %v82
    %128 = vmatprep.subr.mxu0 %v85
    %129 = vmatpush1.msra.mxu0 %v84
    %130 = vmatprep.subr.mxu0 %v87
    %131 = vmatpush1.msra.mxu0 %v86
    %132 = vmatprep.subr.mxu0 %v89
    %133 = vmatpush1.msra.mxu0 %v88
    %134 = vmatprep.subr.mxu0 %v91
    %135 = vmatpush1.msra.mxu0 %v90
    %136 = vmatprep.subr.mxu0 %v93
    %137 = vmatpush1.msra.mxu0 %v92
    %138 = vmatprep.subr.mxu0 %v95
    %139 = vmatpush1.msra.mxu0 %v94
    %140 = vmatprep.subr.mxu0 %v97
    %141 = vmatpush1.msra.mxu0 %v96
    %142 = vmatprep.subr.mxu0 %v99
    %143 = vmatpush1.msra.mxu0 %v98
    %144 = vmatprep.subr.mxu0 %v101
    %145 = vmatpush1.msra.mxu0 %v100
    %146 = vmatprep.subr.mxu0 0.0
    %147 = vmatpush1.msra.mxu0 0.0
    %148 = vmatprep.subr.mxu0 0.0
    %149 = vmatpush1.msra.mxu0 0.0
    %150 = vmatprep.subr.mxu0 0.0
    %151 = vmatpush1.msra.mxu0 0.0
    %152 = vmatprep.subr.mxu0 0.0
    %153 = vmatpush1.msra.mxu0 0.0
    %154 = vmatprep.subr.mxu0 0.0
    %155 = vmatpush1.msra.mxu0 0.0
    %156 = vmatprep.subr.mxu0 0.0
    %157 = vmatpush1.msra.mxu0 0.0
    %158 = vmatprep.subr.mxu0 0.0
    %159 = vmatpush1.msra.mxu0 0.0
    %160 = vmatprep.subr.mxu0 0.0
    %161 = vmatpush1.msra.mxu0 0.0
    %162 = vmatprep.subr.mxu0 0.0
    %163 = vmatpush1.msra.mxu0 0.0
    %164 = vmatprep.subr.mxu0 0.0
    %165 = vmatpush1.msra.mxu0 0.0
    %166 = vmatprep.subr.mxu0 0.0
    %167 = vmatpush1.msra.mxu0 0.0
    %168 = vmatprep.subr.mxu0 0.0
    %169 = vmatpush1.msra.mxu0 0.0
    %170 = vmatprep.subr.mxu0 0.0
    %171 = vmatpush1.msra.mxu0 0.0
    %172 = vmatprep.subr.mxu0 0.0
    %173 = vmatpush1.msra.mxu0 0.0
    %174 = vmatprep.subr.mxu0 0.0
    %175 = vmatpush1.msra.mxu0 0.0
    %176 = vmatprep.subr.mxu0 0.0
    %177 = vmatpush1.msra.mxu0 0.0
    %178 = vmatprep.mubr.f32.mxu0 0.0
    %179 = vmatmul.mubr.f32.gmra.mrb[0].mxu0 %v68
    %v180 = vpop.f32.mrb[0].mxu0
    %v181 = vadd.f32 %v107, %v180
    %v182 = vpop.f32.mrb[0].mxu0
    %v183 = vadd.f32 %v111, %v182
    %184 = vmatprep.mubr.f32.mxu0 0.0
    %185 = vmatmul.mubr.f32.gmra.mrb[0].mxu0 %v69
    %v186 = vpop.f32.mrb[0].mxu0
    %v187 = vadd.f32 %v107, %v186
    %v188 = vpop.f32.mrb[0].mxu0
    %v189 = vadd.f32 %v111, %v188
    %190 = vdwg.mxu0
    %v191 = vmax.f32 %v181, 0.0
    %v192 = vmax.f32 %v183, 0.0
    %v193 = vmax.f32 %v187, 0.0
    %v194 = vmax.f32 %v189, 0.0
    %v195 = vld [vmem:[#allocation7] sm:$0xff]
    %v196 = vld [vmem:[#allocation7 + $0x8] sm:$0xff]
    %v197 = vld [vmem:[#allocation7 + $0x10] sm:$0xff]
    %v198 = vld [vmem:[#allocation7 + $0x18] sm:$0xff]
    %v199 = vld [vmem:[#allocation7 + $0x20] sm:$0xff]
    %v200 = vld [vmem:[#allocation7 + $0x28] sm:$0xff]
    %v201 = vld [vmem:[#allocation7 + $0x30] sm:$0xff]
    %v202 = vld [vmem:[#allocation7 + $0x38] sm:$0xff]
    %v203 = vld [vmem:[#allocation7 + $0x40] sm:$0xff]
    %v204 = vld [vmem:[#allocation7 + $0x48] sm:$0xff]
    %v205 = vld [vmem:[#allocation7 + $0x50] sm:$0xff]
    %v206 = vld [vmem:[#allocation7 + $0x58] sm:$0xff]
    %v207 = vld [vmem:[#allocation7 + $0x60] sm:$0xff]
    %v208 = vld [vmem:[#allocation7 + $0x68] sm:$0xff]
    %v209 = vld [vmem:[#allocation7 + $0x70] sm:$0xff]
    %v210 = vld [vmem:[#allocation7 + $0x78] sm:$0xff]
    %v211 = vld [vmem:[#allocation7 + $0x80] sm:$0xff]
    %v212 = vld [vmem:[#allocation7 + $0x88] sm:$0xff]
    %v213 = vld [vmem:[#allocation7 + $0x90] sm:$0xff]
    %v214 = vld [vmem:[#allocation7 + $0x98] sm:$0xff]
    %v215 = vld [vmem:[#allocation7 + $0xa0] sm:$0xff]
    %v216 = vld [vmem:[#allocation7 + $0xa8] sm:$0xff]
    %v217 = vld [vmem:[#allocation7 + $0xb0] sm:$0xff]
    %v218 = vld [vmem:[#allocation7 + $0xb8] sm:$0xff]
    %v219 = vld [vmem:[#allocation7 + $0xc0] sm:$0xff]
    %v220 = vld [vmem:[#allocation7 + $0xc8] sm:$0xff]
    %v221 = vld [vmem:[#allocation7 + $0xd0] sm:$0xff]
    %v222 = vld [vmem:[#allocation7 + $0xd8] sm:$0xff]
    %v223 = vld [vmem:[#allocation7 + $0xe0] sm:$0xff]
    %v224 = vld [vmem:[#allocation7 + $0xe8] sm:$0xff]
    %v225 = vld [vmem:[#allocation7 + $0xf0] sm:$0xff]
    %v226 = vld [vmem:[#allocation7 + $0xf8] sm:$0xff]
    %v227 = vld [vmem:[%s4] sm:$0x1]
    %v229 = vlaneseq
    %v230 = vshrl.u32 %v229, 7
    %v231 = vsub.s32 0, %v230
    %v232 = vrot.slane %v227, %v231
    %234 = vmatprep.subr.mxu0 0.0
    %235 = vmatpush1.msra.mxu0 %v195
    %236 = vmatprep.subr.mxu0 0.0
    %237 = vmatpush1.msra.mxu0 %v196
    %238 = vmatprep.subr.mxu0 0.0
    %239 = vmatpush1.msra.mxu0 %v197
    %240 = vmatprep.subr.mxu0 0.0
    %241 = vmatpush1.msra.mxu0 %v198
    %242 = vmatprep.subr.mxu0 0.0
    %243 = vmatpush1.msra.mxu0 %v199
    %244 = vmatprep.subr.mxu0 0.0
    %245 = vmatpush1.msra.mxu0 %v200
    %246 = vmatprep.subr.mxu0 0.0
    %247 = vmatpush1.msra.mxu0 %v201
    %248 = vmatprep.subr.mxu0 0.0
    %249 = vmatpush1.msra.mxu0 %v202
    %250 = vmatprep.subr.mxu0 0.0
    %251 = vmatpush1.msra.mxu0 %v203
    %252 = vmatprep.subr.mxu0 0.0
    %253 = vmatpush1.msra.mxu0 %v204
    %254 = vmatprep.subr.mxu0 0.0
    %255 = vmatpush1.msra.mxu0 %v205
    %256 = vmatprep.subr.mxu0 0.0
    %257 = vmatpush1.msra.mxu0 %v206
    %258 = vmatprep.subr.mxu0 0.0
    %259 = vmatpush1.msra.mxu0 %v207
    %260 = vmatprep.subr.mxu0 0.0
    %261 = vmatpush1.msra.mxu0 %v208
    %262 = vmatprep.subr.mxu0 0.0
    %263 = vmatpush1.msra.mxu0 %v209
    %264 = vmatprep.subr.mxu0 0.0
    %265 = vmatpush1.msra.mxu0 %v210
    %266 = vmatprep.subr.mxu0 0.0
    %267 = vmatpush1.msra.mxu0 %v211
    %268 = vmatprep.subr.mxu0 0.0
    %269 = vmatpush1.msra.mxu0 %v212
    %270 = vmatprep.subr.mxu0 0.0
    %271 = vmatpush1.msra.mxu0 %v213
    %272 = vmatprep.subr.mxu0 0.0
    %273 = vmatpush1.msra.mxu0 %v214
    %274 = vmatprep.subr.mxu0 0.0
    %275 = vmatpush1.msra.mxu0 %v215
    %276 = vmatprep.subr.mxu0 0.0
    %277 = vmatpush1.msra.mxu0 %v216
    %278 = vmatprep.subr.mxu0 0.0
    %279 = vmatpush1.msra.mxu0 %v217
    %280 = vmatprep.subr.mxu0 0.0
    %281 = vmatpush1.msra.mxu0 %v218
    %282 = vmatprep.subr.mxu0 0.0
    %283 = vmatpush1.msra.mxu0 %v219
    %284 = vmatprep.subr.mxu0 0.0
    %285 = vmatpush1.msra.mxu0 %v220
    %286 = vmatprep.subr.mxu0 0.0
    %287 = vmatpush1.msra.mxu0 %v221
    %288 = vmatprep.subr.mxu0 0.0
    %289 = vmatpush1.msra.mxu0 %v222
    %290 = vmatprep.subr.mxu0 0.0
    %291 = vmatpush1.msra.mxu0 %v223
    %292 = vmatprep.subr.mxu0 0.0
    %293 = vmatpush1.msra.mxu0 %v224
    %294 = vmatprep.subr.mxu0 0.0
    %295 = vmatpush1.msra.mxu0 %v225
    %296 = vmatprep.subr.mxu0 0.0
    %297 = vmatpush1.msra.mxu0 %v226
    %298 = vmatprep.mubr.f32.mxu0 %v192
    %299 = vmatmul.mubr.f32.gmra.mrb[0].mxu0 %v191
    %v300 = vpop.f32.mrb[0].mxu0
    %v301 = vadd.f32 %v232, %v300
    %v302 = vpop.f32.mrb[0].mxu0
    %303 = vmatprep.mubr.f32.mxu0 %v194
    %304 = vmatmul.mubr.f32.gmra.mrb[0].mxu0 %v193
    %v305 = vpop.f32.mrb[0].mxu0
    %v306 = vadd.f32 %v232, %v305
    %v307 = vpop.f32.mrb[0].mxu0
    %308 = vdwg.mxu0
    %v309 = vadd.f32 %v301, %v68
    %v310 = vadd.f32 %v306, %v69
    %311 = vadd.xlane.f32.xlu0 %v309
    %v312 = vpop.xlane.xlu0 %311
    %313 = vadd.xlane.f32.xlu0 %v310
    %v314 = vpop.xlane.xlu0 %313
    %v315 = vrcp.pop 128.0
    %v316 = vmul.f32 %v312, %v315
    %v317 = vmul.f32 %v314, %v315
    %v318 = vsub.f32 %v309, %v316
    %v319 = vsub.f32 %v310, %v317
    %v320 = vmul.f32 %v318, %v318
    %v321 = vmul.f32 %v319, %v319
    %322 = vadd.xlane.f32.xlu0 %v320
    %v323 = vpop.xlane.xlu0 %322
    %324 = vadd.xlane.f32.xlu0 %v321
    %v325 = vpop.xlane.xlu0 %324
    %v326 = vmul.f32 %v323, %v315
    %v327 = vmul.f32 %v325, %v315
    %v328 = vld [vmem:[%s5] sm:$0x1]
    %v329 = vadd.f32 %v326, 1e-05
    %v330 = vadd.f32 %v327, 1e-05
    %v331 = vrsqrt.pop %v329
    %v332 = vrsqrt.pop %v330
    %v334 = vlaneseq
    %v335 = vshrl.u32 %v334, 7
    %v336 = vsub.s32 0, %v335
    %v337 = vrot.slane %v328, %v336
    %v339 = vmul.f32 %v337, %v331
    %v340 = vmul.f32 %v337, %v332
    %v341 = vmul.f32 %v318, %v339
    %v342 = vmul.f32 %v319, %v340
    %v343 = vld [vmem:[%s6] sm:$0x1]
    %v345 = vlaneseq
    %v346 = vshrl.u32 %v345, 7
    %v347 = vsub.s32 0, %v346
    %v348 = vrot.slane %v343, %v347
    %v350 = vadd.f32 %v341, %v348
    %v351 = vadd.f32 %v342, %v348
    %352 = vst [vmem:[#allocation8] sm:$0xff] %v350
    %353 = vst [vmem:[#allocation8 + $0x8] sm:$0xff] %v351
    // Predicated region
    $region42: #{tpu_custom_call.1} parent=1 // pred_check
      _
    $region43: #{tpu_custom_call.1} parent=1 // pred_check_branch
      %355 = sbr.rel (0) target = $region45
    $region44: #{tpu_custom_call.1} parent=1 // pred_region
      %s357 = ssub.s32 256, 256
      %358 = vsyncadd [#allocation4], %s357
      %s359 = sshll.u32 [#allocation8], 4
      %s360 = int_to_ptr.vmem [resolvable:$true] %s359
      %365 = dma.vmem_to_hbm [thread:$0]  %s360, 256, %s7, [#allocation4], 128, 128, 8
    $region45: #{tpu_custom_call.1} parent=1 // pred_fallthru
      _
    // Predicated region
    $region46: #{tpu_custom_call.1} parent=1 // pred_check
      _
    $region47: #{tpu_custom_call.1} parent=1 // pred_check_branch
      %367 = sbr.rel (0) target = $region49
    $region48: #{tpu_custom_call.1} parent=1 // pred_region
      %368 = dma.done [#allocation4], 256
    $region49: #{tpu_custom_call.1} parent=1 // pred_fallthru
      _
    %369 = vsyncpa [#allocation3], 1
    %370 = vsyncpa [#allocation6], 1
    %371 = vsyncpa [#allocation4], 1

</llo_original>
